<compile_context>
chip_gen: v7x
topology: tpu7x:2x2x1
jax: 0.10.0
libtpu: 0.0.40
codegen_flags: <defaults>
</compile_context>

<pallas_src>
import functools

import jax
import jax.numpy as jnp
from jax.experimental import pallas as pl
from jax.experimental.pallas import tpu as pltpu

EPS = 1e-7
LANES = 128
SUBLANES = 8


def _round_up(x, m):
    return (x + m - 1) // m * m


def _tpu_generation():
    """Returns (VMEM bytes per TensorCore, TensorCores per chip), probed defensively."""
    vmem_cap = 64 * 1024 * 1024          # conservative default (v7x per-TC VMEM)
    cores = 0
    kind = ""
    try:
        kind = jax.devices()[0].device_kind.lower()
    except Exception:
        pass
    try:
        info = pltpu.get_tpu_info()
        cap = int(getattr(info, "vmem_capacity_bytes", 0) or 0)
        if cap > 0:
            vmem_cap = cap
        for attr in ("num_cores", "core_count", "tensorcore_count",
                     "num_tensorcores", "cores_per_chip"):
            v = getattr(info, attr, None)
            if v:
                cores = int(v)
                break
    except Exception:
        pass
    is_v7 = ("v7" in kind) or kind.startswith("tpu7") or ("7x" in kind)
    if cores <= 0:
        cores = 2 if is_v7 else 1
    if is_v7:
        # vmem capacity may be reported per chip on 2-TC parts; clamp to per-TC.
        vmem_cap = min(vmem_cap, 64 * 1024 * 1024)
    return vmem_cap, cores


def _dice_sums_kernel(logits_ref, targets_ref, inter_ref, denom_ref, *,
                      num_k, rows_tile, n_valid, any_tail):
    """Accumulates per-lane partial sums of prob*t and prob+t."""
    p = pl.program_id(0)
    k = pl.program_id(1)

    @pl.when(k == 0)
    def _init():
        inter_ref[...] = jnp.zeros_like(inter_ref)
        denom_ref[...] = jnp.zeros_like(denom_ref)

    b, _, lanes = logits_ref.shape
    groups = rows_tile // SUBLANES

    def _accumulate(masked):
        x = logits_ref[...].astype(jnp.float32)
        t = targets_ref[...].astype(jnp.float32)
        # sigmoid(x) = 0.5 * tanh(x/2) + 0.5  -> single EUP push per vreg.
        prob = 0.5 * jnp.tanh(0.5 * x) + 0.5
        it = prob * t
        dn = prob + t
        if masked:
            row0 = (p * num_k + k) * rows_tile
            rows = jax.lax.broadcasted_iota(jnp.int32, x.shape, 1)
            lane = jax.lax.broadcasted_iota(jnp.int32, x.shape, 2)
            valid = (row0 + rows) * lanes + lane < n_valid
            it = jnp.where(valid, it, 0.0)
            dn = jnp.where(valid, dn, 0.0)
        # Row-axis reduction via cross-vreg VALU adds (sublane structure kept),
        # accumulated into the tiny resident output block.
        inter_ref[...] += jnp.sum(
            it.reshape(b, groups, SUBLANES, lanes), axis=1)[None]
        denom_ref[...] += jnp.sum(
            dn.reshape(b, groups, SUBLANES, lanes), axis=1)[None]

    if not any_tail:
        _accumulate(False)
    else:
        block_end = ((p * num_k + k) * rows_tile + rows_tile) * LANES
        is_tail = block_end > n_valid

        @pl.when(jnp.logical_not(is_tail))
        def _full():
            _accumulate(False)

        @pl.when(is_tail)
        def _tail():
            _accumulate(True)


def dice_loss(logits, targets, *, reduction="mean"):
    """Pallas TPU implementation of DiceLoss(eps=1e-7)."""
    assert logits.shape == targets.shape
    B = int(logits.shape[0])
    logits2d = logits.reshape(B, -1)
    targets2d = targets.reshape(B, -1)
    N = int(logits2d.shape[1])

    vmem_cap, num_cores = _tpu_generation()

    # ---- layout: fold features into lane-dense (rows, 128) tiles. ----------
    rows_raw = pl.cdiv(N, LANES)
    rows8 = _round_up(rows_raw, SUBLANES)
    P = max(1, min(num_cores, rows8 // SUBLANES))   # 2 only on multi-TC chips

    # ---- VMEM-budgeted row tile (accumulators are tiny now). ---------------
    budget = min(int(vmem_cap * 0.55), 64 * 1024 * 1024)
    in_itemsize = logits.dtype.itemsize + targets.dtype.itemsize
    per_row_bytes = B * LANES * 2 * in_itemsize        # 2x = double buffering
    rows_budget = max(SUBLANES, (budget // per_row_bytes) // SUBLANES * SUBLANES)

    rows_tile = min(rows_budget, _round_up(pl.cdiv(rows8, P), SUBLANES))
    num_k = pl.cdiv(rows8, P * rows_tile)
    # Re-clamp the tile so padding waste is bounded by < 8*P*num_k rows.
    rows_tile = _round_up(pl.cdiv(rows8, P * num_k), SUBLANES)
    rows_pad = P * num_k * rows_tile

    # ---- minimal zero padding for the (B, rows, 128) reshape. --------------
    pad_n = rows_pad * LANES - N
    if pad_n:
        logits2d = jnp.pad(logits2d, ((0, 0), (0, pad_n)))
        targets2d = jnp.pad(targets2d, ((0, 0), (0, pad_n)))
    logits3d = logits2d.reshape(B, rows_pad, LANES)
    targets3d = targets2d.reshape(B, rows_pad, LANES)

    kernel = functools.partial(
        _dice_sums_kernel,
        num_k=num_k, rows_tile=rows_tile, n_valid=N, any_tail=bool(pad_n))

    in_spec = pl.BlockSpec((B, rows_tile, LANES),
                           lambda p, k: (0, p * num_k + k, 0))
    out_spec = pl.BlockSpec((1, B, SUBLANES, LANES), lambda p, k: (p, 0, 0, 0))

    blk_in_bytes = B * rows_tile * LANES * in_itemsize
    out_bytes = 2 * 2 * B * SUBLANES * LANES * 4
    vmem_limit = int(min(max(2 * blk_in_bytes + out_bytes + (4 << 20), 32 << 20),
                         vmem_cap))

    inter_part, denom_part = pl.pallas_call(
        kernel,
        out_shape=(jax.ShapeDtypeStruct((P, B, SUBLANES, LANES), jnp.float32),
                   jax.ShapeDtypeStruct((P, B, SUBLANES, LANES), jnp.float32)),
        grid_spec=pltpu.PrefetchScalarGridSpec(
            num_scalar_prefetch=0,
            grid=(P, num_k),
            in_specs=[in_spec, in_spec],
            out_specs=[out_spec, out_spec],
        ),
        compiler_params=pltpu.CompilerParams(
            dimension_semantics=("parallel", "arbitrary"),
            vmem_limit_bytes=vmem_limit,
        ),
    )(logits3d, targets3d)

    # Tiny JAX epilogue (a few KB): combine partition/sublane/lane partials,
    # then the scalar dice math.
    inter = jnp.sum(inter_part, axis=(0, 2, 3))    # (B,)
    denom = jnp.sum(denom_part, axis=(0, 2, 3))    # (B,)
    dice = 2.0 * (inter + EPS) / (denom + EPS)
    loss = 1.0 - dice
    if reduction == "mean":
        return jnp.mean(loss)
    return loss


def dice_loss_ref(logits, targets):
    """Pure-JAX reference mirroring the PyTorch module (reduction='mean')."""
    B = logits.shape[0]
    prob = jax.nn.sigmoid(logits.astype(jnp.float32)).reshape(B, -1)
    t = targets.astype(jnp.float32).reshape(B, -1)
    intersection = jnp.sum(prob * t, axis=1)
    dice = 2.0 * (intersection + EPS) / (
        jnp.sum(prob, axis=1) + jnp.sum(t, axis=1) + EPS)
    return jnp.mean(1.0 - dice)


if __name__ == "__main__":
    key = jax.random.PRNGKey(0)
    k1, k2, k3, k4 = jax.random.split(key, 4)

    # NCHW, small shapes: batch=2, channels=4, spatial=16x16 (1024-aligned path)
    logits = jax.random.normal(k1, (2, 4, 16, 16), dtype=jnp.float32)
    targets = (jax.random.uniform(k2, (2, 4, 16, 16)) > 0.5).astype(jnp.float32)
    loss = jax.block_until_ready(dice_loss(logits, targets))
    ref = jax.block_until_ready(dice_loss_ref(logits, targets))
    assert jnp.allclose(loss, ref, rtol=1e-5, atol=1e-5), (loss, ref)

    # Non-aligned feature count (exercises the in-kernel tail mask path).
    logits2 = jax.random.normal(k3, (2, 3, 15, 15), dtype=jnp.float32)
    targets2 = (jax.random.uniform(k4, (2, 3, 15, 15)) > 0.5).astype(jnp.float32)
    loss2 = jax.block_until_ready(dice_loss(logits2, targets2))
    ref2 = jax.block_until_ready(dice_loss_ref(logits2, targets2))
    assert jnp.allclose(loss2, ref2, rtol=1e-5, atol=1e-5), (loss2, ref2)

    print("KERNEL_OK")
</pallas_src>

<mosaic_0001>
module attributes {stable_mosaic.version = 11 : i64} {
  func.func @_dice_sums_kernel(%arg0: i32, %arg1: i32, %arg2: memref<2x8x128xf32, #tpu.memory_space<vmem>>, %arg3: memref<2x8x128xf32, #tpu.memory_space<vmem>>, %arg4: memref<1x2x8x128xf32, #tpu.memory_space<vmem>>, %arg5: memref<1x2x8x128xf32, #tpu.memory_space<vmem>>) attributes {dimension_semantics = [#tpu.dimension_semantics<parallel>, #tpu.dimension_semantics<arbitrary>], iteration_bounds = array<i64: 1, 1>, scalar_prefetch = 0 : i64, scratch_operands = 0 : i64, tpu.core_type = #tpu.core_type<tc>, window_params = [{transform_indices = @transform_0, window_bounds = array<i64: 2, 8, 128>}, {transform_indices = @transform_1, window_bounds = array<i64: 2, 8, 128>}, {transform_indices = @transform_2, window_bounds = array<i64: 1, 2, 8, 128>}, {transform_indices = @transform_3, window_bounds = array<i64: 1, 2, 8, 128>}]} {
    %c0_i32 = arith.constant 0 : i32
    %0 = arith.cmpi eq, %arg1, %c0_i32 : i32
    %1 = arith.extui %0 : i1 to i32
    %c0_i32_0 = arith.constant 0 : i32
    %2 = arith.cmpi ne, %1, %c0_i32_0 : i32
    scf.if %2 {
      %cst_26 = arith.constant 0.000000e+00 : f32
      %26 = vector.broadcast %cst_26 : f32 to vector<1x2x8x128xf32>
      %c0_27 = arith.constant 0 : index
      %c0_28 = arith.constant 0 : index
      %c0_29 = arith.constant 0 : index
      %c0_30 = arith.constant 0 : index
      %27 = vector.load %arg4[%c0_27, %c0_28, %c0_29, %c0_30] : memref<1x2x8x128xf32, #tpu.memory_space<vmem>>, vector<1x2x8x128xf32>
      tpu.vector_store %arg4[%c0_27, %c0_28, %c0_29, %c0_30], %26 {strides = array<i32>} : memref<1x2x8x128xf32, #tpu.memory_space<vmem>>, vector<1x2x8x128xf32>,
      %cst_31 = arith.constant 0.000000e+00 : f32
      %28 = vector.broadcast %cst_31 : f32 to vector<1x2x8x128xf32>
      %c0_32 = arith.constant 0 : index
      %c0_33 = arith.constant 0 : index
      %c0_34 = arith.constant 0 : index
      %c0_35 = arith.constant 0 : index
      %29 = vector.load %arg5[%c0_32, %c0_33, %c0_34, %c0_35] : memref<1x2x8x128xf32, #tpu.memory_space<vmem>>, vector<1x2x8x128xf32>
      tpu.vector_store %arg5[%c0_32, %c0_33, %c0_34, %c0_35], %28 {strides = array<i32>} : memref<1x2x8x128xf32, #tpu.memory_space<vmem>>, vector<1x2x8x128xf32>,
    } else {
    }
    %c0 = arith.constant 0 : index
    %c0_1 = arith.constant 0 : index
    %c0_2 = arith.constant 0 : index
    %3 = vector.load %arg2[%c0, %c0_1, %c0_2] : memref<2x8x128xf32, #tpu.memory_space<vmem>>, vector<2x8x128xf32>
    %c0_3 = arith.constant 0 : index
    %c0_4 = arith.constant 0 : index
    %c0_5 = arith.constant 0 : index
    %4 = vector.load %arg3[%c0_3, %c0_4, %c0_5] : memref<2x8x128xf32, #tpu.memory_space<vmem>>, vector<2x8x128xf32>
    %cst = arith.constant 5.000000e-01 : f32
    %5 = vector.broadcast %cst : f32 to vector<2x8x128xf32>
    %6 = arith.mulf %5, %3 : vector<2x8x128xf32>
    %7 = math.tanh %6 : vector<2x8x128xf32>
    %cst_6 = arith.constant 5.000000e-01 : f32
    %8 = vector.broadcast %cst_6 : f32 to vector<2x8x128xf32>
    %9 = arith.mulf %8, %7 : vector<2x8x128xf32>
    %cst_7 = arith.constant 5.000000e-01 : f32
    %10 = vector.broadcast %cst_7 : f32 to vector<2x8x128xf32>
    %11 = arith.addf %9, %10 : vector<2x8x128xf32>
    %12 = arith.mulf %11, %4 : vector<2x8x128xf32>
    %13 = arith.addf %11, %4 : vector<2x8x128xf32>
    %c0_8 = arith.constant 0 : index
    %c0_9 = arith.constant 0 : index
    %c0_10 = arith.constant 0 : index
    %c0_11 = arith.constant 0 : index
    %14 = vector.load %arg4[%c0_8, %c0_9, %c0_10, %c0_11] : memref<1x2x8x128xf32, #tpu.memory_space<vmem>>, vector<1x2x8x128xf32>
    %15 = vector.shape_cast %12 : vector<2x8x128xf32> to vector<2x1x8x128xf32>
    %cst_12 = arith.constant dense<0.000000e+00> : vector<2x8x128xf32>
    %16 = vector.multi_reduction <add>, %15, %cst_12 [1] : vector<2x1x8x128xf32> to vector<2x8x128xf32>
    %17 = vector.shape_cast %16 : vector<2x8x128xf32> to vector<1x2x8x128xf32>
    %18 = arith.addf %14, %17 : vector<1x2x8x128xf32>
    %c0_13 = arith.constant 0 : index
    %c0_14 = arith.constant 0 : index
    %c0_15 = arith.constant 0 : index
    %c0_16 = arith.constant 0 : index
    %19 = vector.load %arg4[%c0_13, %c0_14, %c0_15, %c0_16] : memref<1x2x8x128xf32, #tpu.memory_space<vmem>>, vector<1x2x8x128xf32>
    tpu.vector_store %arg4[%c0_13, %c0_14, %c0_15, %c0_16], %18 {strides = array<i32>} : memref<1x2x8x128xf32, #tpu.memory_space<vmem>>, vector<1x2x8x128xf32>,
    %c0_17 = arith.constant 0 : index
    %c0_18 = arith.constant 0 : index
    %c0_19 = arith.constant 0 : index
    %c0_20 = arith.constant 0 : index
    %20 = vector.load %arg5[%c0_17, %c0_18, %c0_19, %c0_20] : memref<1x2x8x128xf32, #tpu.memory_space<vmem>>, vector<1x2x8x128xf32>
    %21 = vector.shape_cast %13 : vector<2x8x128xf32> to vector<2x1x8x128xf32>
    %cst_21 = arith.constant dense<0.000000e+00> : vector<2x8x128xf32>
    %22 = vector.multi_reduction <add>, %21, %cst_21 [1] : vector<2x1x8x128xf32> to vector<2x8x128xf32>
    %23 = vector.shape_cast %22 : vector<2x8x128xf32> to vector<1x2x8x128xf32>
    %24 = arith.addf %20, %23 : vector<1x2x8x128xf32>
    %c0_22 = arith.constant 0 : index
    %c0_23 = arith.constant 0 : index
    %c0_24 = arith.constant 0 : index
    %c0_25 = arith.constant 0 : index
    %25 = vector.load %arg5[%c0_22, %c0_23, %c0_24, %c0_25] : memref<1x2x8x128xf32, #tpu.memory_space<vmem>>, vector<1x2x8x128xf32>
    tpu.vector_store %arg5[%c0_22, %c0_23, %c0_24, %c0_25], %24 {strides = array<i32>} : memref<1x2x8x128xf32, #tpu.memory_space<vmem>>, vector<1x2x8x128xf32>,
    return
  }
  func.func @transform_0(%arg0: i32, %arg1: i32) -> (i32, i32, i32) {
    %c1_i32 = arith.constant 1 : i32
    %0 = arith.muli %arg0, %c1_i32 : i32
    %1 = arith.addi %0, %arg1 : i32
    %c0_i32 = arith.constant 0 : i32
    %c0_i32_0 = arith.constant 0 : i32
    %c0_i32_1 = arith.constant 0 : i32
    return %c0_i32, %1, %c0_i32_0 : i32, i32, i32
  }
  func.func @transform_1(%arg0: i32, %arg1: i32) -> (i32, i32, i32) {
    %c1_i32 = arith.constant 1 : i32
    %0 = arith.muli %arg0, %c1_i32 : i32
    %1 = arith.addi %0, %arg1 : i32
    %c0_i32 = arith.constant 0 : i32
    %c0_i32_0 = arith.constant 0 : i32
    %c0_i32_1 = arith.constant 0 : i32
    return %c0_i32, %1, %c0_i32_0 : i32, i32, i32
  }
  func.func @transform_2(%arg0: i32, %arg1: i32) -> (i32, i32, i32, i32) {
    %c0_i32 = arith.constant 0 : i32
    %c0_i32_0 = arith.constant 0 : i32
    %c0_i32_1 = arith.constant 0 : i32
    %c0_i32_2 = arith.constant 0 : i32
    return %arg0, %c0_i32, %c0_i32_0, %c0_i32_1 : i32, i32, i32, i32
  }
  func.func @transform_3(%arg0: i32, %arg1: i32) -> (i32, i32, i32, i32) {
    %c0_i32 = arith.constant 0 : i32
    %c0_i32_0 = arith.constant 0 : i32
    %c0_i32_1 = arith.constant 0 : i32
    %c0_i32_2 = arith.constant 0 : i32
    return %arg0, %c0_i32, %c0_i32_0, %c0_i32_1 : i32, i32, i32, i32
  }
}

</mosaic_0001>

<llo_original>
// kernel: tpu_custom_call.1
$region0: #{tpu_custom_call.1}
  #allocation0 [shape = 'u32[]', space=smem, size = 0x4, offset = 0x4, fixed_abs, tag = 'smem constant byte address 0x4 - core index']
  #allocation1 [shape = 'u32[144,128]{1,0:T(1,128)}', space=vmem, size = 0x12000, scoped, tag = 'internal scratch']
  %s0 = inlined_call_operand.hbm [shape: f32[2,8,128], index: 0, kind: input, shape index: {}]
  %s1 = inlined_call_operand.hbm [shape: f32[2,8,128], index: 1, kind: input, shape index: {}]
  %s2 = inlined_call_operand.hbm [shape: f32[1,2,8,128], index: 2, kind: output, shape index: {0}]
  %s3 = inlined_call_operand.hbm [shape: f32[1,2,8,128], index: 3, kind: output, shape index: {1}]
  %4 = xla_tuple %s2, %s3
  %s5 = sld [smem:[#allocation0]]
  $region38: #{tpu_custom_call.1} parent=0
    _
  %s7 = ssub.s32 1, %s5
  %s8 = scalar_select 0, %s7, %s5
  $region1: #{tpu_custom_call.1} parent=0
    #allocation2 [shape = 'u8[8192]{0}', space=vmem, size = 0x2000, scoped, tag = 'input window, operand 0, single buffered']
    #allocation3 [shape = 's32[1]{0}', space=sflag, size = 0x4, scoped, tag = 'scoped memory for tpu_custom_call.1']
    #allocation4 [shape = 's32[1]{0}', space=sflag, size = 0x4, scoped, tag = 'scoped memory for tpu_custom_call.1']
    #allocation5 [shape = 'u8[8192]{0}', space=vmem, size = 0x2000, scoped, tag = 'input window, operand 1, single buffered']
    #allocation6 [shape = 's32[1]{0}', space=sflag, size = 0x4, scoped, tag = 'scoped memory for tpu_custom_call.1']
    #allocation7 [shape = 'u8[8192]{0}', space=vmem, size = 0x2000, scoped, tag = 'output window, operand 0, single buffered']
    #allocation8 [shape = 'u8[8192]{0}', space=vmem, size = 0x2000, scoped, tag = 'output window, operand 1, single buffered']
    #allocation9 [shape = 's32[1]{0}', space=sflag, size = 0x4, scoped, tag = 'scoped memory for tpu_custom_call.1']
    %9 = vsyncpa [#allocation3], 0
    %10 = vsyncpa [#allocation6], 0
    %11 = vsyncpa [#allocation4], 0
    %12 = vsyncpa [#allocation9], 0
    // Predicated region
    $region2: #{tpu_custom_call.1} parent=1 // pred_check
      _
    $region3: #{tpu_custom_call.1} parent=1 // pred_check_branch
      %14 = sbr.rel (0) target = $region5
    $region4: #{tpu_custom_call.1} parent=1 // pred_region
      %s15 = sadd.s32 0, 0
      %s17 = ssub.s32 256, 256
      %18 = vsyncadd [#allocation3], %s17
      %s19 = smul.addr %s15, 128
      %s20 = scalar_lea.hbm %s0, %s19
      %s21 = sshll.u32 [#allocation2], 4
      %s22 = int_to_ptr.vmem [resolvable:$true] %s21
      %27 = dma.hbm_to_vmem [thread:$0]  %s20, 256, %s22, [#allocation3], 128, 128, 8
    $region5: #{tpu_custom_call.1} parent=1 // pred_fallthru
      _
    // Predicated region
    $region6: #{tpu_custom_call.1} parent=1 // pred_check
      _
    $region7: #{tpu_custom_call.1} parent=1 // pred_check_branch
      %29 = sbr.rel (0) target = $region9
    $region8: #{tpu_custom_call.1} parent=1 // pred_region
      %s30 = sadd.s32 0, 0
      %s32 = ssub.s32 256, 256
      %33 = vsyncadd [#allocation6], %s32
      %s34 = smul.addr %s30, 128
      %s35 = scalar_lea.hbm %s1, %s34
      %s36 = sshll.u32 [#allocation5], 4
      %s37 = int_to_ptr.vmem [resolvable:$true] %s36
      %42 = dma.hbm_to_vmem [thread:$0]  %s35, 256, %s37, [#allocation6], 128, 128, 8
    $region9: #{tpu_custom_call.1} parent=1 // pred_fallthru
      _
    // Predicated region
    $region10: #{tpu_custom_call.1} parent=1 // pred_check
      _
    $region11: #{tpu_custom_call.1} parent=1 // pred_check_branch
      %44 = sbr.rel (0) target = $region13
    $region12: #{tpu_custom_call.1} parent=1 // pred_region
      %45 = dma.done [#allocation3], 256
    $region13: #{tpu_custom_call.1} parent=1 // pred_fallthru
      _
    // Predicated region
    $region14: #{tpu_custom_call.1} parent=1 // pred_check
      _
    $region15: #{tpu_custom_call.1} parent=1 // pred_check_branch
      %47 = sbr.rel (0) target = $region17
    $region16: #{tpu_custom_call.1} parent=1 // pred_region
      %48 = dma.done [#allocation6], 256
    $region17: #{tpu_custom_call.1} parent=1 // pred_fallthru
      _
    %s49 = sadd.s32 0, 0
    %s50 = sadd.s32 0, 0
    %p51 = scmp.eq.s32.totalorder 0, 0
    // Predicated region
    $region18: #{tpu_custom_call.1} parent=1 // pred_check
      %p52 = pneg %p51
    $region19: #{tpu_custom_call.1} parent=1 // pred_check_branch
      %54 = sbr.rel (%p52) target = $region21
    $region20: #{tpu_custom_call.1} parent=1 // pred_region
      %55 = vst [vmem:[#allocation7] sm:$0xff] 0.0
      %56 = vst [vmem:[#allocation7 + $0x8] sm:$0xff] 0.0
      %57 = vst [vmem:[#allocation8] sm:$0xff] 0.0
      %58 = vst [vmem:[#allocation8 + $0x8] sm:$0xff] 0.0
    $region21: #{tpu_custom_call.1} parent=1 // pred_fallthru
      _
    %v59 = vld [vmem:[#allocation2] sm:$0xff]
    %v60 = vld [vmem:[#allocation2 + $0x8] sm:$0xff]
    %v61 = vld [vmem:[#allocation5] sm:$0xff]
    %v62 = vld [vmem:[#allocation5 + $0x8] sm:$0xff]
    %v63 = vmul.f32 %v59, 0.5
    %v64 = vmul.f32 %v60, 0.5
    %v65 = vtanh.pop %v63
    %v66 = vtanh.pop %v64
    %v67 = vmul.f32 %v65, 0.5
    %v68 = vmul.f32 %v66, 0.5
    %v69 = vadd.f32 %v67, 0.5
    %v70 = vadd.f32 %v68, 0.5
    %v71 = vmul.f32 %v69, %v61
    %v72 = vmul.f32 %v70, %v62
    %v73 = vadd.f32 %v69, %v61
    %v74 = vadd.f32 %v70, %v62
    %v75 = vld [vmem:[#allocation7] sm:$0xff]
    %v76 = vld [vmem:[#allocation7 + $0x8] sm:$0xff]
    %v77 = vadd.f32 %v71, 0.0
    %v78 = vadd.f32 %v72, 0.0
    %v79 = vadd.f32 %v75, %v77
    %v80 = vadd.f32 %v76, %v78
    %81 = vst [vmem:[#allocation7] sm:$0xff] %v79
    %82 = vst [vmem:[#allocation7 + $0x8] sm:$0xff] %v80
    %v83 = vld [vmem:[#allocation8] sm:$0xff]
    %v84 = vld [vmem:[#allocation8 + $0x8] sm:$0xff]
    %v85 = vadd.f32 %v73, 0.0
    %v86 = vadd.f32 %v74, 0.0
    %v87 = vadd.f32 %v83, %v85
    %v88 = vadd.f32 %v84, %v86
    %89 = vst [vmem:[#allocation8] sm:$0xff] %v87
    %90 = vst [vmem:[#allocation8 + $0x8] sm:$0xff] %v88
    // Predicated region
    $region22: #{tpu_custom_call.1} parent=1 // pred_check
      _
    $region23: #{tpu_custom_call.1} parent=1 // pred_check_branch
      %92 = sbr.rel (0) target = $region25
    $region24: #{tpu_custom_call.1} parent=1 // pred_region
      %s94 = ssub.s32 256, 256
      %95 = vsyncadd [#allocation4], %s94
      %s96 = sshll.u32 [#allocation7], 4
      %s97 = int_to_ptr.vmem [resolvable:$true] %s96
      %102 = dma.vmem_to_hbm [thread:$0]  %s97, 256, %s2, [#allocation4], 128, 128, 8
    $region25: #{tpu_custom_call.1} parent=1 // pred_fallthru
      _
    // Predicated region
    $region26: #{tpu_custom_call.1} parent=1 // pred_check
      _
    $region27: #{tpu_custom_call.1} parent=1 // pred_check_branch
      %104 = sbr.rel (0) target = $region29
    $region28: #{tpu_custom_call.1} parent=1 // pred_region
      %s106 = ssub.s32 256, 256
      %107 = vsyncadd [#allocation9], %s106
      %s108 = sshll.u32 [#allocation8], 4
      %s109 = int_to_ptr.vmem [resolvable:$true] %s108
      %114 = dma.vmem_to_hbm [thread:$0]  %s109, 256, %s3, [#allocation9], 128, 128, 8
    $region29: #{tpu_custom_call.1} parent=1 // pred_fallthru
      _
    // Predicated region
    $region30: #{tpu_custom_call.1} parent=1 // pred_check
      _
    $region31: #{tpu_custom_call.1} parent=1 // pred_check_branch
      %116 = sbr.rel (0) target = $region33
    $region32: #{tpu_custom_call.1} parent=1 // pred_region
      %117 = dma.done [#allocation4], 256
    $region33: #{tpu_custom_call.1} parent=1 // pred_fallthru
      _
    // Predicated region
    $region34: #{tpu_custom_call.1} parent=1 // pred_check
      _
    $region35: #{tpu_custom_call.1} parent=1 // pred_check_branch
      %119 = sbr.rel (0) target = $region37
    $region36: #{tpu_custom_call.1} parent=1 // pred_region
      %120 = dma.done [#allocation9], 256
    $region37: #{tpu_custom_call.1} parent=1 // pred_fallthru
      _
    %121 = vsyncpa [#allocation3], 1
    %122 = vsyncpa [#allocation6], 1
    %123 = vsyncpa [#allocation4], 1
    %124 = vsyncpa [#allocation9], 1

</llo_original>
